<compile_context>
chip_gen: v6e
topology: v6e:2x2x1
jax: 0.10.0
libtpu: 0.0.40
codegen_flags: <defaults>
</compile_context>

<pallas_src>
import functools

import jax
import jax.numpy as jnp
import numpy as np
from jax.experimental import pallas as pl
from jax.experimental.pallas import tpu as pltpu

_LANE = 128
_ROWQ = 16  # row quantum: full sublane packing even for bf16 blocks


def _round_up(x, m):
    return (x + m - 1) // m * m


def _num_tensorcores():
    """2 on v7x (two TensorCores per chip), else 1 (v5e/v6e)."""
    try:
        kind = jax.devices()[0].device_kind.lower()
    except Exception:
        return 1
    return 2 if ("v7" in kind or "7x" in kind) else 1


def _gen_limits(num_tc):
    """(max row tile, vmem_limit_bytes) per generation."""
    if num_tc == 2:               # v7x: 64 MiB physical VMEM -> stay at 32 MiB scoped
        return 2048, 32 * 1024 * 1024
    return 4096, 64 * 1024 * 1024  # v5e/v6e: 128 MiB physical VMEM


def _row_tiling(M, num_tc, max_tm):
    """Pick (tm, m_pad, grid_m). Big tiles; split only when 2 TCs can use it."""
    mq = _round_up(max(M, _ROWQ), _ROWQ)
    steps = pl.cdiv(mq, max_tm)
    if num_tc == 2 and mq > _ROWQ:
        steps = max(steps, 2)
        steps += steps % 2          # even step count: both TCs get equal tiles
    tm = min(max_tm, _round_up(pl.cdiv(mq, steps), _ROWQ))
    m_pad = _round_up(mq, tm)
    return tm, m_pad, m_pad // tm


def _pad_to(a, shape, dtype):
    """Zero-pad a 2-D array up to `shape` and cast to `dtype`."""
    out = jnp.zeros(shape, dtype)
    return out.at[: a.shape[0], : a.shape[1]].set(a.astype(dtype))


def _conv_weight_to_matrix(w_oihw):
    """PyTorch (Cout, Cin, kh, kw) -> (kh*kw*Cin, Cout), matching im2col cols."""
    cout, cin, kh, kw = w_oihw.shape
    return jnp.transpose(w_oihw, (2, 3, 1, 0)).reshape(kh * kw * cin, cout)


def _im2col_padded(x_nhwc, kh, kw, stride, pad, m_pad, k_pad):
    """(N,H,W,C) -> bf16 patch matrix built directly at (m_pad, k_pad).

    Column order is (kh, kw, c).  The padding to the kernel's tile-aligned
    shape happens here, as part of patch construction, instead of as a separate
    full-size pad copy right before the memory-bound kernel.
    """
    n, h, w, c = x_nhwc.shape
    oh = (h + 2 * pad - kh) // stride + 1
    ow = (w + 2 * pad - kw) // stride + 1
    xp = jnp.pad(x_nhwc.astype(jnp.bfloat16),
                 ((0, 0), (pad, pad), (pad, pad), (0, 0)))
    taps = [xp[:, ih:ih + stride * oh:stride, iw:iw + stride * ow:stride, :]
            for ih in range(kh) for iw in range(kw)]          # 9 x (N,OH,OW,C)
    patches = jnp.stack(taps, axis=3).reshape(n * oh * ow, kh * kw * c)
    m, k = patches.shape
    return jnp.pad(patches, ((0, m_pad - m), (0, k_pad - k))), (n, oh, ow)


# ----------------------------------------------------------------------------
# Pallas kernels (bf16 MXU operands, f32 accumulate / bias / ReLU)
# ----------------------------------------------------------------------------
def _gemm_kernel(x_ref, w_ref, b_ref, o_ref, *, relu):
    acc = jnp.dot(x_ref[...], w_ref[...], preferred_element_type=jnp.float32)
    acc = acc + b_ref[...]                       # (TM, N) + (1, N)
    if relu:
        acc = jnp.maximum(acc, 0.0)
    o_ref[...] = acc.astype(o_ref.dtype)


def _gemm_gemm_kernel(x_ref, w1_ref, b1_ref, w2_ref, b2_ref, o_ref, *, relu1):
    # conv2 GEMM + bias + ReLU, then the fused 1x1 conv3 GEMM + bias,
    # all without leaving VMEM/registers.
    h = jnp.dot(x_ref[...], w1_ref[...], preferred_element_type=jnp.float32)
    h = h + b1_ref[...]
    if relu1:
        h = jnp.maximum(h, 0.0)
    y = jnp.dot(h.astype(jnp.bfloat16), w2_ref[...],
                preferred_element_type=jnp.float32)
    o_ref[...] = (y + b2_ref[...]).astype(o_ref.dtype)


# ----------------------------------------------------------------------------
# Conv (+ ReLU) (+ fused 1x1 conv) as a single tiled GEMM launch
# ----------------------------------------------------------------------------
def conv2d_gemm(x_nhwc, w_oihw, b, *, stride, pad, relu,
                fuse_w=None, fuse_b=None, out_dtype=jnp.float32):
    """relu(conv(x, w) + b) [ then 1x1 conv with fuse_w/fuse_b ] in one launch.

    Returns NHWC `out_dtype` activations of shape (N, OH, OW, n_out).
    """
    n, h, w_, c = x_nhwc.shape
    cout, cin, kh, kw = w_oihw.shape
    assert cin == c, (cin, c)
    oh = (h + 2 * pad - kh) // stride + 1
    ow = (w_ + 2 * pad - kw) // stride + 1
    M = n * oh * ow
    K = kh * kw * cin
    N1 = cout
    fuse = fuse_w is not None
    n_out = fuse_w.shape[0] if fuse else N1

    num_tc = _num_tensorcores()
    max_tm, vmem_limit = _gen_limits(num_tc)
    tm, m_pad, grid_m = _row_tiling(M, num_tc, max_tm)
    K_pad = _round_up(K, _ROWQ)                  # clean (bf16) sublane boundary
    N_last = _round_up(n_out, _LANE)             # lane-dense unmasked stores

    xb, _ = _im2col_padded(x_nhwc, kh, kw, stride, pad, m_pad, K_pad)
    w1m = _conv_weight_to_matrix(w_oihw)

    if fuse:
        w1p = _pad_to(w1m, (K_pad, N1), jnp.bfloat16)
        b1p = b.reshape(1, N1).astype(jnp.float32)
        w2m = _conv_weight_to_matrix(fuse_w)                       # (N1, n_out)
        w2p = _pad_to(w2m, (N1, N_last), jnp.bfloat16)
        b2p = _pad_to(fuse_b.reshape(1, -1), (1, N_last), jnp.float32)
        kernel = functools.partial(_gemm_gemm_kernel, relu1=relu)
        operands = (xb, w1p, b1p, w2p, b2p)
        in_specs = [
            pl.BlockSpec((tm, K_pad), lambda i: (i, 0)),
            pl.BlockSpec((K_pad, N1), lambda i: (0, 0)),
            pl.BlockSpec((1, N1), lambda i: (0, 0)),
            pl.BlockSpec((N1, N_last), lambda i: (0, 0)),
            pl.BlockSpec((1, N_last), lambda i: (0, 0)),
        ]
    else:
        w1p = _pad_to(w1m, (K_pad, N_last), jnp.bfloat16)
        b1p = _pad_to(b.reshape(1, -1), (1, N_last), jnp.float32)
        kernel = functools.partial(_gemm_kernel, relu=relu)
        operands = (xb, w1p, b1p)
        in_specs = [
            pl.BlockSpec((tm, K_pad), lambda i: (i, 0)),
            pl.BlockSpec((K_pad, N_last), lambda i: (0, 0)),
            pl.BlockSpec((1, N_last), lambda i: (0, 0)),
        ]

    out = pl.pallas_call(
        kernel,
        out_shape=jax.ShapeDtypeStruct((m_pad, N_last), out_dtype),
        grid=(grid_m,),
        in_specs=in_specs,
        out_specs=pl.BlockSpec((tm, N_last), lambda i: (i, 0)),
        compiler_params=pltpu.CompilerParams(
            dimension_semantics=("parallel",),
            vmem_limit_bytes=vmem_limit,
        ),
    )(*operands)
    # Padded tail rows / channels (garbage from zero-padded inputs) sliced off.
    return out[:M, :n_out].reshape(n, oh, ow, n_out)


# ----------------------------------------------------------------------------
# Encoder forward
# ----------------------------------------------------------------------------
@jax.jit
def encoder_forward(x_nchw, params):
    x = jnp.transpose(x_nchw, (0, 2, 3, 1))                        # NCHW -> NHWC

    # conv1 (3 -> 32, stride 2, pad 1) + ReLU; intermediate stored as bf16.
    y1 = conv2d_gemm(x, params["w1"], params["b1"], stride=2, pad=1,
                     relu=True, out_dtype=jnp.bfloat16)

    # conv2 (32 -> 64, stride 2, pad 1) + ReLU, fused with conv3 (1x1 -> latent).
    y = conv2d_gemm(y1, params["w2"], params["b2"], stride=2, pad=1, relu=True,
                    fuse_w=params["w3"], fuse_b=params["b3"],
                    out_dtype=jnp.float32)

    return jnp.transpose(y, (0, 3, 1, 2))                          # NHWC -> NCHW


def init_params(key, latent_dim=16):
    ks = jax.random.split(key, 6)
    scale = 0.1
    return {
        "w1": scale * jax.random.normal(ks[0], (32, 3, 3, 3), jnp.float32),
        "b1": scale * jax.random.normal(ks[1], (32,), jnp.float32),
        "w2": scale * jax.random.normal(ks[2], (64, 32, 3, 3), jnp.float32),
        "b2": scale * jax.random.normal(ks[3], (64,), jnp.float32),
        "w3": scale * jax.random.normal(ks[4], (latent_dim, 64, 1, 1), jnp.float32),
        "b3": scale * jax.random.normal(ks[5], (latent_dim,), jnp.float32),
    }


# ----------------------------------------------------------------------------
# References (for correctness checks)
# ----------------------------------------------------------------------------
def _ref_conv(x, w, b, stride, pad, *, bf16):
    if bf16:  # same bf16-operand / f32-accumulate contract as the kernels
        x = x.astype(jnp.bfloat16)
        w = w.astype(jnp.bfloat16)
    out = jax.lax.conv_general_dilated(
        x, w, window_strides=(stride, stride),
        padding=((pad, pad), (pad, pad)),
        dimension_numbers=("NCHW", "OIHW", "NCHW"),
        preferred_element_type=jnp.float32)
    return out + b.reshape(1, -1, 1, 1).astype(jnp.float32)


def encoder_reference(x_nchw, params, *, bf16):
    h = jax.nn.relu(_ref_conv(x_nchw, params["w1"], params["b1"], 2, 1, bf16=bf16))
    if bf16:  # kernel pipeline hands a bf16 intermediate to conv2
        h = h.astype(jnp.bfloat16)
    h = jax.nn.relu(_ref_conv(h, params["w2"], params["b2"], 2, 1, bf16=bf16))
    return _ref_conv(h, params["w3"], params["b3"], 1, 0, bf16=bf16)


if __name__ == "__main__":
    key = jax.random.PRNGKey(0)
    kx, kp = jax.random.split(key)

    # Small input consistent with the module: NCHW, 3 input channels.
    x = jax.random.normal(kx, (2, 3, 16, 16), jnp.float32)
    params = init_params(kp, latent_dim=16)

    out = jax.block_until_ready(encoder_forward(x, params))
    assert out.shape == (2, 16, 4, 4), out.shape

    # Tight check against a reference using the same bf16-operand / f32-accum
    # numerics as the kernels (validates im2col ordering, fusion, bias, ReLU).
    ref_bf16 = jax.block_until_ready(encoder_reference(x, params, bf16=True))
    np.testing.assert_allclose(np.asarray(out), np.asarray(ref_bf16),
                               rtol=1e-2, atol=1e-2)

    # Loose sanity check against the pure-f32 PyTorch-equivalent math
    # (bounds the bf16-operand deviation from the original module).
    ref_f32 = jax.block_until_ready(encoder_reference(x, params, bf16=False))
    np.testing.assert_allclose(np.asarray(out), np.asarray(ref_f32),
                               rtol=1e-1, atol=1e-1)

    print("KERNEL_OK")
</pallas_src>

<mosaic_0001>
module attributes {stable_mosaic.version = 11 : i64} {
  func.func @_gemm_kernel(%arg0: i32, %arg1: memref<128x32xbf16, #tpu.memory_space<vmem>>, %arg2: memref<32x128xbf16, #tpu.memory_space<vmem>>, %arg3: memref<1x128xf32, #tpu.memory_space<vmem>>, %arg4: memref<128x128xbf16, #tpu.memory_space<vmem>>) attributes {dimension_semantics = [#tpu.dimension_semantics<parallel>], iteration_bounds = array<i64: 1>, scalar_prefetch = 0 : i64, scratch_operands = 0 : i64, tpu.core_type = #tpu.core_type<tc>, window_params = [{transform_indices = @transform_0, window_bounds = array<i64: 128, 32>}, {pipeline_mode = #tpu.pipeline_mode<synchronous>, transform_indices = @transform_1, window_bounds = array<i64: 32, 128>}, {pipeline_mode = #tpu.pipeline_mode<synchronous>, transform_indices = @transform_2, window_bounds = array<i64: 1, 128>}, {transform_indices = @transform_3, window_bounds = array<i64: 128, 128>}]} {
    %c0 = arith.constant 0 : index
    %c0_0 = arith.constant 0 : index
    %0 = vector.load %arg1[%c0, %c0_0] : memref<128x32xbf16, #tpu.memory_space<vmem>>, vector<128x32xbf16>
    %c0_1 = arith.constant 0 : index
    %c0_2 = arith.constant 0 : index
    %1 = vector.load %arg2[%c0_1, %c0_2] : memref<32x128xbf16, #tpu.memory_space<vmem>>, vector<32x128xbf16>
    %cst = arith.constant dense<0.000000e+00> : vector<128x128xf32>
    %2 = tpu.matmul %0, %1, %cst {dimension_numbers = #tpu.dot_dimension_numbers<[1], [0], [0], [1], [0, 0, 1, 1], [], []>} : vector<128x32xbf16>, vector<32x128xbf16>, vector<128x128xf32> -> vector<128x128xf32>
    %c0_3 = arith.constant 0 : index
    %c0_4 = arith.constant 0 : index
    %3 = vector.load %arg3[%c0_3, %c0_4] : memref<1x128xf32, #tpu.memory_space<vmem>>, vector<1x128xf32>
    %4 = vector.broadcast %3 : vector<1x128xf32> to vector<128x128xf32>
    %5 = arith.addf %2, %4 : vector<128x128xf32>
    %cst_5 = arith.constant 0.000000e+00 : f32
    %6 = vector.broadcast %cst_5 : f32 to vector<128x128xf32>
    %7 = arith.maximumf %5, %6 : vector<128x128xf32>
    %8 = arith.truncf %7 : vector<128x128xf32> to vector<128x128xbf16>
    %c0_6 = arith.constant 0 : index
    %c0_7 = arith.constant 0 : index
    %9 = vector.load %arg4[%c0_6, %c0_7] : memref<128x128xbf16, #tpu.memory_space<vmem>>, vector<128x128xbf16>
    tpu.vector_store %arg4[%c0_6, %c0_7], %8 {strides = array<i32>} : memref<128x128xbf16, #tpu.memory_space<vmem>>, vector<128x128xbf16>,
    return
  }
  func.func @transform_0(%arg0: i32) -> (i32, i32) {
    %c0_i32 = arith.constant 0 : i32
    %c0_i32_0 = arith.constant 0 : i32
    return %arg0, %c0_i32 : i32, i32
  }
  func.func @transform_1(%arg0: i32) -> (i32, i32) {
    %c0_i32 = arith.constant 0 : i32
    %c0_i32_0 = arith.constant 0 : i32
    %c0_i32_1 = arith.constant 0 : i32
    return %c0_i32, %c0_i32_0 : i32, i32
  }
  func.func @transform_2(%arg0: i32) -> (i32, i32) {
    %c0_i32 = arith.constant 0 : i32
    %c0_i32_0 = arith.constant 0 : i32
    %c0_i32_1 = arith.constant 0 : i32
    return %c0_i32, %c0_i32_0 : i32, i32
  }
  func.func @transform_3(%arg0: i32) -> (i32, i32) {
    %c0_i32 = arith.constant 0 : i32
    %c0_i32_0 = arith.constant 0 : i32
    return %arg0, %c0_i32 : i32, i32
  }
}

module attributes {stable_mosaic.version = 11 : i64} {
  func.func @_gemm_gemm_kernel(%arg0: i32, %arg1: memref<32x288xbf16, #tpu.memory_space<vmem>>, %arg2: memref<288x64xbf16, #tpu.memory_space<vmem>>, %arg3: memref<1x64xf32, #tpu.memory_space<vmem>>, %arg4: memref<64x128xbf16, #tpu.memory_space<vmem>>, %arg5: memref<1x128xf32, #tpu.memory_space<vmem>>, %arg6: memref<32x128xf32, #tpu.memory_space<vmem>>) attributes {dimension_semantics = [#tpu.dimension_semantics<parallel>], iteration_bounds = array<i64: 1>, scalar_prefetch = 0 : i64, scratch_operands = 0 : i64, tpu.core_type = #tpu.core_type<tc>, window_params = [{transform_indices = @transform_0, window_bounds = array<i64: 32, 288>}, {pipeline_mode = #tpu.pipeline_mode<synchronous>, transform_indices = @transform_1, window_bounds = array<i64: 288, 64>}, {pipeline_mode = #tpu.pipeline_mode<synchronous>, transform_indices = @transform_2, window_bounds = array<i64: 1, 64>}, {pipeline_mode = #tpu.pipeline_mode<synchronous>, transform_indices = @transform_3, window_bounds = array<i64: 64, 128>}, {pipeline_mode = #tpu.pipeline_mode<synchronous>, transform_indices = @transform_4, window_bounds = array<i64: 1, 128>}, {transform_indices = @transform_5, window_bounds = array<i64: 32, 128>}]} {
    %c0 = arith.constant 0 : index
    %c0_0 = arith.constant 0 : index
    %0 = vector.load %arg1[%c0, %c0_0] : memref<32x288xbf16, #tpu.memory_space<vmem>>, vector<32x288xbf16>
    %c0_1 = arith.constant 0 : index
    %c0_2 = arith.constant 0 : index
    %1 = vector.load %arg2[%c0_1, %c0_2] : memref<288x64xbf16, #tpu.memory_space<vmem>>, vector<288x64xbf16>
    %cst = arith.constant dense<0.000000e+00> : vector<32x64xf32>
    %2 = tpu.matmul %0, %1, %cst {dimension_numbers = #tpu.dot_dimension_numbers<[1], [0], [0], [1], [0, 0, 1, 1], [], []>} : vector<32x288xbf16>, vector<288x64xbf16>, vector<32x64xf32> -> vector<32x64xf32>
    %c0_3 = arith.constant 0 : index
    %c0_4 = arith.constant 0 : index
    %3 = vector.load %arg3[%c0_3, %c0_4] : memref<1x64xf32, #tpu.memory_space<vmem>>, vector<1x64xf32>
    %4 = vector.broadcast %3 : vector<1x64xf32> to vector<32x64xf32>
    %5 = arith.addf %2, %4 : vector<32x64xf32>
    %cst_5 = arith.constant 0.000000e+00 : f32
    %6 = vector.broadcast %cst_5 : f32 to vector<32x64xf32>
    %7 = arith.maximumf %5, %6 : vector<32x64xf32>
    %8 = arith.truncf %7 : vector<32x64xf32> to vector<32x64xbf16>
    %c0_6 = arith.constant 0 : index
    %c0_7 = arith.constant 0 : index
    %9 = vector.load %arg4[%c0_6, %c0_7] : memref<64x128xbf16, #tpu.memory_space<vmem>>, vector<64x128xbf16>
    %cst_8 = arith.constant dense<0.000000e+00> : vector<32x128xf32>
    %10 = tpu.matmul %8, %9, %cst_8 {dimension_numbers = #tpu.dot_dimension_numbers<[1], [0], [0], [1], [0, 0, 1, 1], [], []>} : vector<32x64xbf16>, vector<64x128xbf16>, vector<32x128xf32> -> vector<32x128xf32>
    %c0_9 = arith.constant 0 : index
    %c0_10 = arith.constant 0 : index
    %11 = vector.load %arg5[%c0_9, %c0_10] : memref<1x128xf32, #tpu.memory_space<vmem>>, vector<1x128xf32>
    %12 = vector.broadcast %11 : vector<1x128xf32> to vector<32x128xf32>
    %13 = arith.addf %10, %12 : vector<32x128xf32>
    %c0_11 = arith.constant 0 : index
    %c0_12 = arith.constant 0 : index
    %14 = vector.load %arg6[%c0_11, %c0_12] : memref<32x128xf32, #tpu.memory_space<vmem>>, vector<32x128xf32>
    tpu.vector_store %arg6[%c0_11, %c0_12], %13 {strides = array<i32>} : memref<32x128xf32, #tpu.memory_space<vmem>>, vector<32x128xf32>,
    return
  }
  func.func @transform_0(%arg0: i32) -> (i32, i32) {
    %c0_i32 = arith.constant 0 : i32
    %c0_i32_0 = arith.constant 0 : i32
    return %arg0, %c0_i32 : i32, i32
  }
  func.func @transform_1(%arg0: i32) -> (i32, i32) {
    %c0_i32 = arith.constant 0 : i32
    %c0_i32_0 = arith.constant 0 : i32
    %c0_i32_1 = arith.constant 0 : i32
    return %c0_i32, %c0_i32_0 : i32, i32
  }
  func.func @transform_2(%arg0: i32) -> (i32, i32) {
    %c0_i32 = arith.constant 0 : i32
    %c0_i32_0 = arith.constant 0 : i32
    %c0_i32_1 = arith.constant 0 : i32
    return %c0_i32, %c0_i32_0 : i32, i32
  }
  func.func @transform_3(%arg0: i32) -> (i32, i32) {
    %c0_i32 = arith.constant 0 : i32
    %c0_i32_0 = arith.constant 0 : i32
    %c0_i32_1 = arith.constant 0 : i32
    return %c0_i32, %c0_i32_0 : i32, i32
  }
  func.func @transform_4(%arg0: i32) -> (i32, i32) {
    %c0_i32 = arith.constant 0 : i32
    %c0_i32_0 = arith.constant 0 : i32
    %c0_i32_1 = arith.constant 0 : i32
    return %c0_i32, %c0_i32_0 : i32, i32
  }
  func.func @transform_5(%arg0: i32) -> (i32, i32) {
    %c0_i32 = arith.constant 0 : i32
    %c0_i32_0 = arith.constant 0 : i32
    return %arg0, %c0_i32 : i32, i32
  }
}

</mosaic_0001>

<llo_original>
// kernel: encoder_forward.2
$region0: #{encoder_forward.2}
  #allocation0 [shape = 'u32[]', space=smem, size = 0x4, offset = 0x4, fixed_abs, tag = 'smem constant byte address 0x4 - core index']
  #allocation1 [shape = 'u32[144,128]{1,0:T(1,128)}', space=vmem, size = 0x12000, scoped, tag = 'internal scratch']
  %s0 = inlined_call_operand.vmem [shape: bf16[128,32], index: 0, kind: input, shape index: {}]
  %s1 = inlined_call_operand.vmem [shape: bf16[32,128], index: 1, kind: input, shape index: {}]
  %s2 = inlined_call_operand.vmem [shape: f32[1,128], index: 2, kind: input, shape index: {}]
  %s3 = inlined_call_operand.vmem [shape: bf16[128,128], index: 3, kind: output, shape index: {}]
  %s4 = sld [smem:[#allocation0]]
  $region22: #{encoder_forward.2} parent=0
    _
  %s6 = ssub.s32 1, %s4
  %s7 = scalar_select 0, %s6, %s4
  // Predicated region
  $region2: #{encoder_forward.2} parent=0 // pred_check
    _
  $region3: #{encoder_forward.2} parent=0 // pred_check_branch
    %9 = sbr.rel (0) target = $region5
  $region4: #{encoder_forward.2} parent=0 // pred_region
    _
  $region5: #{encoder_forward.2} parent=0 // pred_fallthru
    _
  // Predicated region
  $region6: #{encoder_forward.2} parent=0 // pred_check
    _
  $region7: #{encoder_forward.2} parent=0 // pred_check_branch
    %11 = sbr.rel (0) target = $region9
  $region8: #{encoder_forward.2} parent=0 // pred_region
    _
  $region9: #{encoder_forward.2} parent=0 // pred_fallthru
    _
  // Predicated region
  $region10: #{encoder_forward.2} parent=0 // pred_check
    _
  $region11: #{encoder_forward.2} parent=0 // pred_check_branch
    %13 = sbr.rel (0) target = $region13
  $region12: #{encoder_forward.2} parent=0 // pred_region
    _
  $region13: #{encoder_forward.2} parent=0 // pred_fallthru
    _
  %v15 = vld [vmem:[%s0] sm:$0xf]
  %v16 = vld [vmem:[%s0 + $0x4] sm:$0xf]
  %v17 = vld [vmem:[%s0 + $0x8] sm:$0xf]
  %v18 = vld [vmem:[%s0 + $0xc] sm:$0xf]
  %v19 = vld [vmem:[%s0 + $0x10] sm:$0xf]
  %v20 = vld [vmem:[%s0 + $0x14] sm:$0xf]
  %v21 = vld [vmem:[%s0 + $0x18] sm:$0xf]
  %v22 = vld [vmem:[%s0 + $0x1c] sm:$0xf]
  %v23 = vld [vmem:[%s0 + $0x20] sm:$0xf]
  %v24 = vld [vmem:[%s0 + $0x24] sm:$0xf]
  %v25 = vld [vmem:[%s0 + $0x28] sm:$0xf]
  %v26 = vld [vmem:[%s0 + $0x2c] sm:$0xf]
  %v27 = vld [vmem:[%s0 + $0x30] sm:$0xf]
  %v28 = vld [vmem:[%s0 + $0x34] sm:$0xf]
  %v29 = vld [vmem:[%s0 + $0x38] sm:$0xf]
  %v30 = vld [vmem:[%s0 + $0x3c] sm:$0xf]
  %v31 = vld [vmem:[%s1] sm:$0xf]
  %v32 = vld [vmem:[%s1 + $0x4] sm:$0xf]
  %v33 = vld [vmem:[%s1 + $0x8] sm:$0xf]
  %v34 = vld [vmem:[%s1 + $0xc] sm:$0xf]
  %v35 = vld [vmem:[%s2] sm:$0x1]
  %v37 = vlaneseq
  %v38 = vshrl.u32 %v37, 7
  %v39 = vsub.s32 0, %v38
  %v40 = vrot.slane %v35, %v39
  %v58 = vunpack.c.l.b16 %v15
  %v59 = vunpack.c.l.b16 %v16
  %v60 = vunpack.c.l.b16 %v17
  %v61 = vunpack.c.l.b16 %v18
  %v62 = vunpack.c.l.b16 %v19
  %v63 = vunpack.c.l.b16 %v20
  %v64 = vunpack.c.l.b16 %v21
  %v65 = vunpack.c.l.b16 %v22
  %v66 = vunpack.c.l.b16 %v23
  %v67 = vunpack.c.l.b16 %v24
  %v68 = vunpack.c.l.b16 %v25
  %v69 = vunpack.c.l.b16 %v26
  %v70 = vunpack.c.l.b16 %v27
  %v71 = vunpack.c.l.b16 %v28
  %v72 = vunpack.c.l.b16 %v29
  %v73 = vunpack.c.l.b16 %v30
  %v74 = vpack.c.b16 %v59, %v58
  %v75 = vpack.c.b16 %v61, %v60
  %v76 = vpack.c.b16 %v63, %v62
  %v77 = vpack.c.b16 %v65, %v64
  %v78 = vpack.c.b16 %v67, %v66
  %v79 = vpack.c.b16 %v69, %v68
  %v80 = vpack.c.b16 %v71, %v70
  %v81 = vpack.c.b16 %v73, %v72
  %v86 = vunpack.c.l.b16 %v31
  %v87 = vunpack.c.l.b16 %v32
  %v88 = vunpack.c.l.b16 %v33
  %v89 = vunpack.c.l.b16 %v34
  %v90 = vpack.c.b16 %v87, %v86
  %v91 = vpack.c.b16 %v89, %v88
  %vm94 = vcmask 261120
  %v96 = vsel %vm94, %v74, 0
  %v99 = vsel %vm94, %v75, 0
  %v102 = vsel %vm94, %v76, 0
  %v105 = vsel %vm94, %v77, 0
  %v108 = vsel %vm94, %v78, 0
  %v111 = vsel %vm94, %v79, 0
  %v114 = vsel %vm94, %v80, 0
  %v117 = vsel %vm94, %v81, 0
  %119 = vmatprep.subr.bf16.mxu0 0
  %120 = vmatpush1.bf16.msra.mxu0 0
  %121 = vmatprep.subr.bf16.mxu0 0
  %122 = vmatpush1.bf16.msra.mxu0 0
  %123 = vmatprep.subr.bf16.mxu0 0
  %124 = vmatpush1.bf16.msra.mxu0 0
  %125 = vmatprep.subr.bf16.mxu0 0
  %126 = vmatpush1.bf16.msra.mxu0 0
  %127 = vmatprep.subr.bf16.mxu0 0
  %128 = vmatpush1.bf16.msra.mxu0 0
  %129 = vmatprep.subr.bf16.mxu0 0
  %130 = vmatpush1.bf16.msra.mxu0 0
  %131 = vmatprep.subr.bf16.mxu0 0
  %132 = vmatpush1.bf16.msra.mxu0 %v91
  %133 = vmatprep.subr.bf16.mxu0 0
  %134 = vmatpush1.bf16.msra.mxu0 %v90
  %135 = vmatprep.subr.bf16.mxu0 0
  %136 = vmatpush2.bf16.msra.mxu0 0
  %137 = vmatprep.subr.bf16.mxu0 0
  %138 = vmatpush2.bf16.msra.mxu0 0
  %139 = vmatprep.subr.bf16.mxu0 0
  %140 = vmatpush2.bf16.msra.mxu0 0
  %141 = vmatprep.subr.bf16.mxu0 0
  %142 = vmatpush2.bf16.msra.mxu0 0
  %143 = vmatprep.subr.bf16.mxu0 0
  %144 = vmatpush2.bf16.msra.mxu0 0
  %145 = vmatprep.subr.bf16.mxu0 0
  %146 = vmatpush2.bf16.msra.mxu0 0
  %147 = vmatprep.subr.bf16.mxu0 0
  %148 = vmatpush2.bf16.msra.mxu0 0
  %149 = vmatprep.subr.bf16.mxu0 0
  %150 = vmatpush2.bf16.msra.mxu0 0
  %151 = vmatprep.mubr.bf16.mxu0 0
  %152 = vmatmul.mubr.bf16.gmra.mxu0 %v96
  %v153 = vpop.f32.mrf.mxu0
  %v154 = vadd.f32 %v40, %v153
  %v155 = vpop.f32.mrf.mxu0
  %v156 = vpop.f32.mrf.mxu0
  %v157 = vadd.f32 %v40, %v156
  %v158 = vpop.f32.mrf.mxu0
  %159 = vmatprep.mubr.bf16.mxu0 0
  %160 = vmatmul.mubr.bf16.gmra.mxu0 %v99
  %v161 = vpop.f32.mrf.mxu0
  %v162 = vadd.f32 %v40, %v161
  %v163 = vpop.f32.mrf.mxu0
  %v164 = vpop.f32.mrf.mxu0
  %v165 = vadd.f32 %v40, %v164
  %v166 = vpop.f32.mrf.mxu0
  %167 = vmatprep.mubr.bf16.mxu0 0
  %168 = vmatmul.mubr.bf16.gmra.mxu0 %v102
  %v169 = vpop.f32.mrf.mxu0
  %v170 = vadd.f32 %v40, %v169
  %v171 = vpop.f32.mrf.mxu0
  %v172 = vpop.f32.mrf.mxu0
  %v173 = vadd.f32 %v40, %v172
  %v174 = vpop.f32.mrf.mxu0
  %175 = vmatprep.mubr.bf16.mxu0 0
  %176 = vmatmul.mubr.bf16.gmra.mxu0 %v105
  %v177 = vpop.f32.mrf.mxu0
  %v178 = vadd.f32 %v40, %v177
  %v179 = vpop.f32.mrf.mxu0
  %v180 = vpop.f32.mrf.mxu0
  %v181 = vadd.f32 %v40, %v180
  %v182 = vpop.f32.mrf.mxu0
  %183 = vmatprep.mubr.bf16.mxu0 0
  %184 = vmatmul.mubr.bf16.gmra.mxu0 %v108
  %v185 = vpop.f32.mrf.mxu0
  %v186 = vadd.f32 %v40, %v185
  %v187 = vpop.f32.mrf.mxu0
  %v188 = vpop.f32.mrf.mxu0
  %v189 = vadd.f32 %v40, %v188
  %v190 = vpop.f32.mrf.mxu0
  %191 = vmatprep.mubr.bf16.mxu0 0
  %192 = vmatmul.mubr.bf16.gmra.mxu0 %v111
  %v193 = vpop.f32.mrf.mxu0
  %v194 = vadd.f32 %v40, %v193
  %v195 = vpop.f32.mrf.mxu0
  %v196 = vpop.f32.mrf.mxu0
  %v197 = vadd.f32 %v40, %v196
  %v198 = vpop.f32.mrf.mxu0
  %199 = vmatprep.mubr.bf16.mxu0 0
  %200 = vmatmul.mubr.bf16.gmra.mxu0 %v114
  %v201 = vpop.f32.mrf.mxu0
  %v202 = vadd.f32 %v40, %v201
  %v203 = vpop.f32.mrf.mxu0
  %v204 = vpop.f32.mrf.mxu0
  %v205 = vadd.f32 %v40, %v204
  %v206 = vpop.f32.mrf.mxu0
  %207 = vmatprep.mubr.bf16.mxu0 0
  %208 = vmatmul.mubr.bf16.gmra.mxu0 %v117
  %v209 = vpop.f32.mrf.mxu0
  %v210 = vadd.f32 %v40, %v209
  %v211 = vpop.f32.mrf.mxu0
  %v212 = vpop.f32.mrf.mxu0
  %v213 = vadd.f32 %v40, %v212
  %v214 = vpop.f32.mrf.mxu0
  %215 = vdwg.mxu0
  %v216 = vmax.f32 %v154, 0.0
  %v217 = vmax.f32 %v157, 0.0
  %v218 = vmax.f32 %v162, 0.0
  %v219 = vmax.f32 %v165, 0.0
  %v220 = vmax.f32 %v170, 0.0
  %v221 = vmax.f32 %v173, 0.0
  %v222 = vmax.f32 %v178, 0.0
  %v223 = vmax.f32 %v181, 0.0
  %v224 = vmax.f32 %v186, 0.0
  %v225 = vmax.f32 %v189, 0.0
  %v226 = vmax.f32 %v194, 0.0
  %v227 = vmax.f32 %v197, 0.0
  %v228 = vmax.f32 %v202, 0.0
  %v229 = vmax.f32 %v205, 0.0
  %v230 = vmax.f32 %v210, 0.0
  %v231 = vmax.f32 %v213, 0.0
  %v232 = vpack.c.bf16 %v217, %v216
  %v233 = vpack.c.bf16 %v219, %v218
  %v234 = vpack.c.bf16 %v221, %v220
  %v235 = vpack.c.bf16 %v223, %v222
  %v236 = vpack.c.bf16 %v225, %v224
  %v237 = vpack.c.bf16 %v227, %v226
  %v238 = vpack.c.bf16 %v229, %v228
  %v239 = vpack.c.bf16 %v231, %v230
  %v248 = vunpack.c.l.b16 %v232
  %v249 = vunpack.c.h.b16 %v232
  %v250 = vunpack.c.l.b16 %v233
  %v251 = vunpack.c.h.b16 %v233
  %v252 = vunpack.c.l.b16 %v234
  %v253 = vunpack.c.h.b16 %v234
  %v254 = vunpack.c.l.b16 %v235
  %v255 = vunpack.c.h.b16 %v235
  %v256 = vunpack.c.l.b16 %v236
  %v257 = vunpack.c.h.b16 %v236
  %v258 = vunpack.c.l.b16 %v237
  %v259 = vunpack.c.h.b16 %v237
  %v260 = vunpack.c.l.b16 %v238
  %v261 = vunpack.c.h.b16 %v238
  %v262 = vunpack.c.l.b16 %v239
  %v263 = vunpack.c.h.b16 %v239
  %v264 = vpack.c.b16 %v248, %v248
  %v265 = vpack.c.b16 %v249, %v249
  %v266 = vpack.c.b16 %v250, %v250
  %v267 = vpack.c.b16 %v251, %v251
  %v268 = vpack.c.b16 %v252, %v252
  %v269 = vpack.c.b16 %v253, %v253
  %v270 = vpack.c.b16 %v254, %v254
  %v271 = vpack.c.b16 %v255, %v255
  %v272 = vpack.c.b16 %v256, %v256
  %v273 = vpack.c.b16 %v257, %v257
  %v274 = vpack.c.b16 %v258, %v258
  %v275 = vpack.c.b16 %v259, %v259
  %v276 = vpack.c.b16 %v260, %v260
  %v277 = vpack.c.b16 %v261, %v261
  %v278 = vpack.c.b16 %v262, %v262
  %v279 = vpack.c.b16 %v263, %v263
  %296 = vst [vmem:[%s3] sm:$0xf] %v264
  %297 = vst [vmem:[%s3 + $0x4] sm:$0xf] %v265
  %298 = vst [vmem:[%s3 + $0x8] sm:$0xf] %v266
  %299 = vst [vmem:[%s3 + $0xc] sm:$0xf] %v267
  %300 = vst [vmem:[%s3 + $0x10] sm:$0xf] %v268
  %301 = vst [vmem:[%s3 + $0x14] sm:$0xf] %v269
  %302 = vst [vmem:[%s3 + $0x18] sm:$0xf] %v270
  %303 = vst [vmem:[%s3 + $0x1c] sm:$0xf] %v271
  %304 = vst [vmem:[%s3 + $0x20] sm:$0xf] %v272
  %305 = vst [vmem:[%s3 + $0x24] sm:$0xf] %v273
  %306 = vst [vmem:[%s3 + $0x28] sm:$0xf] %v274
  %307 = vst [vmem:[%s3 + $0x2c] sm:$0xf] %v275
  %308 = vst [vmem:[%s3 + $0x30] sm:$0xf] %v276
  %309 = vst [vmem:[%s3 + $0x34] sm:$0xf] %v277
  %310 = vst [vmem:[%s3 + $0x38] sm:$0xf] %v278
  %311 = vst [vmem:[%s3 + $0x3c] sm:$0xf] %v279
  // Predicated region
  $region14: #{encoder_forward.2} parent=0 // pred_check
    _
  $region15: #{encoder_forward.2} parent=0 // pred_check_branch
    %313 = sbr.rel (0) target = $region17
  $region16: #{encoder_forward.2} parent=0 // pred_region
    _
  $region17: #{encoder_forward.2} parent=0 // pred_fallthru
    _
  // Predicated region
  $region18: #{encoder_forward.2} parent=0 // pred_check
    _
  $region19: #{encoder_forward.2} parent=0 // pred_check_branch
    %315 = sbr.rel (0) target = $region21
  $region20: #{encoder_forward.2} parent=0 // pred_region
    _
  $region21: #{encoder_forward.2} parent=0 // pred_fallthru
    _

// kernel: encoder_forward.3
$region0: #{encoder_forward.3}
  #allocation0 [shape = 'u32[]', space=smem, size = 0x4, offset = 0x4, fixed_abs, tag = 'smem constant byte address 0x4 - core index']
  #allocation1 [shape = 'u32[144,128]{1,0:T(1,128)}', space=vmem, size = 0x12000, scoped, tag = 'internal scratch']
  %s0 = inlined_call_operand.vmem [shape: bf16[32,288], index: 0, kind: input, shape index: {}]
  %s1 = inlined_call_operand.vmem [shape: bf16[288,64], index: 1, kind: input, shape index: {}]
  %s2 = inlined_call_operand.vmem [shape: f32[1,64], index: 2, kind: input, shape index: {}]
  %s3 = inlined_call_operand.vmem [shape: bf16[64,128], index: 3, kind: input, shape index: {}]
  %s4 = inlined_call_operand.vmem [shape: f32[1,128], index: 4, kind: input, shape index: {}]
  %s5 = inlined_call_operand.hbm [shape: f32[32,128], index: 5, kind: output, shape index: {}]
  %s6 = sld [smem:[#allocation0]]
  $region30: #{encoder_forward.3} parent=0
    _
  %s8 = ssub.s32 1, %s6
  %s9 = scalar_select 0, %s8, %s6
  $region1: #{encoder_forward.3} parent=0
    #allocation2 [shape = 'u8[16384]{0}', space=vmem, size = 0x4000, scoped, tag = 'output window, operand 0, single buffered']
    #allocation3 [shape = 's32[1]{0}', space=sflag, size = 0x4, scoped, tag = 'scoped memory for encoder_forward.3']
    %10 = vsyncpa [#allocation3], 0
    // Predicated region
    $region2: #{encoder_forward.3} parent=1 // pred_check
      _
    $region3: #{encoder_forward.3} parent=1 // pred_check_branch
      %12 = sbr.rel (0) target = $region5
    $region4: #{encoder_forward.3} parent=1 // pred_region
      _
    $region5: #{encoder_forward.3} parent=1 // pred_fallthru
      _
    // Predicated region
    $region6: #{encoder_forward.3} parent=1 // pred_check
      _
    $region7: #{encoder_forward.3} parent=1 // pred_check_branch
      %14 = sbr.rel (0) target = $region9
    $region8: #{encoder_forward.3} parent=1 // pred_region
      _
    $region9: #{encoder_forward.3} parent=1 // pred_fallthru
      _
    // Predicated region
    $region10: #{encoder_forward.3} parent=1 // pred_check
      _
    $region11: #{encoder_forward.3} parent=1 // pred_check_branch
      %16 = sbr.rel (0) target = $region13
    $region12: #{encoder_forward.3} parent=1 // pred_region
      _
    $region13: #{encoder_forward.3} parent=1 // pred_fallthru
      _
    // Predicated region
    $region14: #{encoder_forward.3} parent=1 // pred_check
      _
    $region15: #{encoder_forward.3} parent=1 // pred_check_branch
      %18 = sbr.rel (0) target = $region17
    $region16: #{encoder_forward.3} parent=1 // pred_region
      _
    $region17: #{encoder_forward.3} parent=1 // pred_fallthru
      _
    // Predicated region
    $region18: #{encoder_forward.3} parent=1 // pred_check
      _
    $region19: #{encoder_forward.3} parent=1 // pred_check_branch
      %20 = sbr.rel (0) target = $region21
    $region20: #{encoder_forward.3} parent=1 // pred_region
      _
    $region21: #{encoder_forward.3} parent=1 // pred_fallthru
      _
    %v22 = vld [vmem:[%s0] sm:$0xff]
    %v23 = vld [vmem:[%s0 + $0x8] sm:$0xf]
    %v24 = vld [vmem:[%s0 + $0xc] sm:$0xff]
    %v25 = vld [vmem:[%s0 + $0x14] sm:$0xf]
    %v26 = vld [vmem:[%s0 + $0x18] sm:$0xff]
    %v27 = vld [vmem:[%s0 + $0x20] sm:$0xf]
    %v28 = vld [vmem:[%s0 + $0x24] sm:$0xff]
    %v29 = vld [vmem:[%s0 + $0x2c] sm:$0xf]
    %v30 = vld [vmem:[%s1] sm:$0xf]
    %v31 = vld [vmem:[%s1 + $0x4] sm:$0xf]
    %v32 = vld [vmem:[%s1 + $0x8] sm:$0xf]
    %v33 = vld [vmem:[%s1 + $0xc] sm:$0xf]
    %v34 = vld [vmem:[%s1 + $0x10] sm:$0xf]
    %v35 = vld [vmem:[%s1 + $0x14] sm:$0xf]
    %v36 = vld [vmem:[%s1 + $0x18] sm:$0xf]
    %v37 = vld [vmem:[%s1 + $0x1c] sm:$0xf]
    %v38 = vld [vmem:[%s1 + $0x20] sm:$0xf]
    %v39 = vld [vmem:[%s1 + $0x24] sm:$0xf]
    %v40 = vld [vmem:[%s1 + $0x28] sm:$0xf]
    %v41 = vld [vmem:[%s1 + $0x2c] sm:$0xf]
    %v42 = vld [vmem:[%s1 + $0x30] sm:$0xf]
    %v43 = vld [vmem:[%s1 + $0x34] sm:$0xf]
    %v44 = vld [vmem:[%s1 + $0x38] sm:$0xf]
    %v45 = vld [vmem:[%s1 + $0x3c] sm:$0xf]
    %v46 = vld [vmem:[%s1 + $0x40] sm:$0xf]
    %v47 = vld [vmem:[%s1 + $0x44] sm:$0xf]
    %v48 = vld [vmem:[%s1 + $0x48] sm:$0xf]
    %v49 = vld [vmem:[%s1 + $0x4c] sm:$0xf]
    %v50 = vld [vmem:[%s1 + $0x50] sm:$0xf]
    %v51 = vld [vmem:[%s1 + $0x54] sm:$0xf]
    %v52 = vld [vmem:[%s1 + $0x58] sm:$0xf]
    %v53 = vld [vmem:[%s1 + $0x5c] sm:$0xf]
    %v54 = vld [vmem:[%s1 + $0x60] sm:$0xf]
    %v55 = vld [vmem:[%s1 + $0x64] sm:$0xf]
    %v56 = vld [vmem:[%s1 + $0x68] sm:$0xf]
    %v57 = vld [vmem:[%s1 + $0x6c] sm:$0xf]
    %v58 = vld [vmem:[%s1 + $0x70] sm:$0xf]
    %v59 = vld [vmem:[%s1 + $0x74] sm:$0xf]
    %v60 = vld [vmem:[%s1 + $0x78] sm:$0xf]
    %v61 = vld [vmem:[%s1 + $0x7c] sm:$0xf]
    %v62 = vld [vmem:[%s1 + $0x80] sm:$0xf]
    %v63 = vld [vmem:[%s1 + $0x84] sm:$0xf]
    %v64 = vld [vmem:[%s1 + $0x88] sm:$0xf]
    %v65 = vld [vmem:[%s1 + $0x8c] sm:$0xf]
    %v66 = vld [vmem:[%s2] sm:$0x1]
    %v68 = vlaneseq
    %v69 = vshrl.u32 %v68, 7
    %v70 = vsub.s32 0, %v69
    %v71 = vrot.slane %v66, %v70
    %v81 = vunpack.c.l.b16 %v22
    %v82 = vunpack.c.h.b16 %v22
    %v83 = vunpack.c.l.b16 %v23
    %v84 = vunpack.c.l.b16 %v24
    %v85 = vunpack.c.h.b16 %v24
    %v86 = vunpack.c.l.b16 %v25
    %v87 = vunpack.c.l.b16 %v26
    %v88 = vunpack.c.h.b16 %v26
    %v89 = vunpack.c.l.b16 %v27
    %v90 = vunpack.c.l.b16 %v28
    %v91 = vunpack.c.h.b16 %v28
    %v92 = vunpack.c.l.b16 %v29
    %v93 = vpack.c.b16 %v84, %v81
    %v94 = vpack.c.b16 %v85, %v82
    %v95 = vpack.c.b16 %v86, %v83
    %v96 = vpack.c.b16 %v90, %v87
    %v97 = vpack.c.b16 %v91, %v88
    %v98 = vpack.c.b16 %v92, %v89
    %v139 = vunpack.c.l.b16 %v30
    %v140 = vunpack.c.l.b16 %v31
    %v141 = vunpack.c.l.b16 %v32
    %v142 = vunpack.c.l.b16 %v33
    %v143 = vunpack.c.l.b16 %v34
    %v144 = vunpack.c.l.b16 %v35
    %v145 = vunpack.c.l.b16 %v36
    %v146 = vunpack.c.l.b16 %v37
    %v147 = vunpack.c.l.b16 %v38
    %v148 = vunpack.c.l.b16 %v39
    %v149 = vunpack.c.l.b16 %v40
    %v150 = vunpack.c.l.b16 %v41
    %v151 = vunpack.c.l.b16 %v42
    %v152 = vunpack.c.l.b16 %v43
    %v153 = vunpack.c.l.b16 %v44
    %v154 = vunpack.c.l.b16 %v45
    %v155 = vunpack.c.l.b16 %v46
    %v156 = vunpack.c.l.b16 %v47
    %v157 = vunpack.c.l.b16 %v48
    %v158 = vunpack.c.l.b16 %v49
    %v159 = vunpack.c.l.b16 %v50
    %v160 = vunpack.c.l.b16 %v51
    %v161 = vunpack.c.l.b16 %v52
    %v162 = vunpack.c.l.b16 %v53
    %v163 = vunpack.c.l.b16 %v54
    %v164 = vunpack.c.l.b16 %v55
    %v165 = vunpack.c.l.b16 %v56
    %v166 = vunpack.c.l.b16 %v57
    %v167 = vunpack.c.l.b16 %v58
    %v168 = vunpack.c.l.b16 %v59
    %v169 = vunpack.c.l.b16 %v60
    %v170 = vunpack.c.l.b16 %v61
    %v171 = vunpack.c.l.b16 %v62
    %v172 = vunpack.c.l.b16 %v63
    %v173 = vunpack.c.l.b16 %v64
    %v174 = vunpack.c.l.b16 %v65
    %v175 = vpack.c.b16 %v140, %v139
    %v176 = vpack.c.b16 %v142, %v141
    %v177 = vpack.c.b16 %v144, %v143
    %v178 = vpack.c.b16 %v146, %v145
    %v179 = vpack.c.b16 %v148, %v147
    %v180 = vpack.c.b16 %v150, %v149
    %v181 = vpack.c.b16 %v152, %v151
    %v182 = vpack.c.b16 %v154, %v153
    %v183 = vpack.c.b16 %v156, %v155
    %v184 = vpack.c.b16 %v158, %v157
    %v185 = vpack.c.b16 %v160, %v159
    %v186 = vpack.c.b16 %v162, %v161
    %v187 = vpack.c.b16 %v164, %v163
    %v188 = vpack.c.b16 %v166, %v165
    %v189 = vpack.c.b16 %v168, %v167
    %v190 = vpack.c.b16 %v170, %v169
    %v191 = vpack.c.b16 %v172, %v171
    %v192 = vpack.c.b16 %v174, %v173
    %vm211 = vcmask 261120
    %v213 = vsel %vm211, %v95, 0
    %v216 = vsel %vm211, %v98, 0
    %218 = vmatprep.subr.bf16.mxu0 0
    %219 = vmatpush1.bf16.msra.mxu0 %v182
    %220 = vmatprep.subr.bf16.mxu0 0
    %221 = vmatpush1.bf16.msra.mxu0 %v181
    %222 = vmatprep.subr.bf16.mxu0 0
    %223 = vmatpush1.bf16.msra.mxu0 %v180
    %224 = vmatprep.subr.bf16.mxu0 0
    %225 = vmatpush1.bf16.msra.mxu0 %v179
    %226 = vmatprep.subr.bf16.mxu0 0
    %227 = vmatpush1.bf16.msra.mxu0 %v178
    %228 = vmatprep.subr.bf16.mxu0 0
    %229 = vmatpush1.bf16.msra.mxu0 %v177
    %230 = vmatprep.subr.bf16.mxu0 0
    %231 = vmatpush1.bf16.msra.mxu0 %v176
    %232 = vmatprep.subr.bf16.mxu0 0
    %233 = vmatpush1.bf16.msra.mxu0 %v175
    %234 = vmatprep.subr.bf16.mxu0 0
    %235 = vmatpush2.bf16.msra.mxu0 %v190
    %236 = vmatprep.subr.bf16.mxu0 0
    %237 = vmatpush2.bf16.msra.mxu0 %v189
    %238 = vmatprep.subr.bf16.mxu0 0
    %239 = vmatpush2.bf16.msra.mxu0 %v188
    %240 = vmatprep.subr.bf16.mxu0 0
    %241 = vmatpush2.bf16.msra.mxu0 %v187
    %242 = vmatprep.subr.bf16.mxu0 0
    %243 = vmatpush2.bf16.msra.mxu0 %v186
    %244 = vmatprep.subr.bf16.mxu0 0
    %245 = vmatpush2.bf16.msra.mxu0 %v185
    %246 = vmatprep.subr.bf16.mxu0 0
    %247 = vmatpush2.bf16.msra.mxu0 %v184
    %248 = vmatprep.subr.bf16.mxu0 0
    %249 = vmatpush2.bf16.msra.mxu0 %v183
    %250 = vmatprep.mubr.bf16.mxu0 %v94
    %251 = vmatmul.mubr.bf16.gmra.mxu0 %v93
    %v252 = vpop.f32.mrf.mxu0
    %v253 = vadd.f32 %v71, %v252
    %v254 = vpop.f32.mrf.mxu0
    %v255 = vpop.f32.mrf.mxu0
    %v256 = vadd.f32 %v71, %v255
    %v257 = vpop.f32.mrf.mxu0
    %258 = vmatprep.mubr.bf16.mxu0 %v97
    %259 = vmatmul.mubr.bf16.gmra.mxu0 %v96
    %v260 = vpop.f32.mrf.mxu0
    %v261 = vadd.f32 %v71, %v260
    %v262 = vpop.f32.mrf.mxu0
    %v263 = vpop.f32.mrf.mxu0
    %v264 = vadd.f32 %v71, %v263
    %v265 = vpop.f32.mrf.mxu0
    %266 = vdwg.mxu0
    %267 = vmatprep.subr.bf16.mxu0 0
    %268 = vmatpush1.bf16.msra.mxu0 0
    %269 = vmatprep.subr.bf16.mxu0 0
    %270 = vmatpush1.bf16.msra.mxu0 0
    %271 = vmatprep.subr.bf16.mxu0 0
    %272 = vmatpush1.bf16.msra.mxu0 0
    %273 = vmatprep.subr.bf16.mxu0 0
    %274 = vmatpush1.bf16.msra.mxu0 0
    %275 = vmatprep.subr.bf16.mxu0 0
    %276 = vmatpush1.bf16.msra.mxu0 0
    %277 = vmatprep.subr.bf16.mxu0 0
    %278 = vmatpush1.bf16.msra.mxu0 0
    %279 = vmatprep.subr.bf16.mxu0 0
    %280 = vmatpush1.bf16.msra.mxu0 %v192
    %281 = vmatprep.subr.bf16.mxu0 0
    %282 = vmatpush1.bf16.msra.mxu0 %v191
    %283 = vmatprep.subr.bf16.mxu0 0
    %284 = vmatpush2.bf16.msra.mxu0 0
    %285 = vmatprep.subr.bf16.mxu0 0
    %286 = vmatpush2.bf16.msra.mxu0 0
    %287 = vmatprep.subr.bf16.mxu0 0
    %288 = vmatpush2.bf16.msra.mxu0 0
    %289 = vmatprep.subr.bf16.mxu0 0
    %290 = vmatpush2.bf16.msra.mxu0 0
    %291 = vmatprep.subr.bf16.mxu0 0
    %292 = vmatpush2.bf16.msra.mxu0 0
    %293 = vmatprep.subr.bf16.mxu0 0
    %294 = vmatpush2.bf16.msra.mxu0 0
    %295 = vmatprep.subr.bf16.mxu0 0
    %296 = vmatpush2.bf16.msra.mxu0 0
    %297 = vmatprep.subr.bf16.mxu0 0
    %298 = vmatpush2.bf16.msra.mxu0 0
    %299 = vmatprep.mubr.bf16.mxu0 0
    %300 = vmatmul.mubr.bf16.gmra.mxu0 %v213
    %v301 = vpop.f32.mrf.mxu0
    %v302 = vadd.f32 %v253, %v301
    %v303 = vpop.f32.mrf.mxu0
    %v304 = vpop.f32.mrf.mxu0
    %v305 = vadd.f32 %v256, %v304
    %v306 = vpop.f32.mrf.mxu0
    %307 = vmatprep.mubr.bf16.mxu0 0
    %308 = vmatmul.mubr.bf16.gmra.mxu0 %v216
    %v309 = vpop.f32.mrf.mxu0
    %v310 = vadd.f32 %v261, %v309
    %v311 = vpop.f32.mrf.mxu0
    %v312 = vpop.f32.mrf.mxu0
    %v313 = vadd.f32 %v264, %v312
    %v314 = vpop.f32.mrf.mxu0
    %315 = vdwg.mxu0
    %v316 = vmax.f32 %v302, 0.0
    %v317 = vmax.f32 %v305, 0.0
    %v318 = vmax.f32 %v310, 0.0
    %v319 = vmax.f32 %v313, 0.0
    %v320 = vpack.c.bf16 %v317, %v316
    %v321 = vpack.c.bf16 %v319, %v318
    %v322 = vld [vmem:[%s3] sm:$0xf]
    %v323 = vld [vmem:[%s3 + $0x4] sm:$0xf]
    %v324 = vld [vmem:[%s3 + $0x8] sm:$0xf]
    %v325 = vld [vmem:[%s3 + $0xc] sm:$0xf]
    %v326 = vld [vmem:[%s3 + $0x10] sm:$0xf]
    %v327 = vld [vmem:[%s3 + $0x14] sm:$0xf]
    %v328 = vld [vmem:[%s3 + $0x18] sm:$0xf]
    %v329 = vld [vmem:[%s3 + $0x1c] sm:$0xf]
    %v330 = vld [vmem:[%s4] sm:$0x1]
    %v332 = vlaneseq
    %v333 = vshrl.u32 %v332, 7
    %v334 = vsub.s32 0, %v333
    %v335 = vrot.slane %v330, %v334
    %v345 = vunpack.c.l.b16 %v322
    %v346 = vunpack.c.l.b16 %v323
    %v347 = vunpack.c.l.b16 %v324
    %v348 = vunpack.c.l.b16 %v325
    %v349 = vunpack.c.l.b16 %v326
    %v350 = vunpack.c.l.b16 %v327
    %v351 = vunpack.c.l.b16 %v328
    %v352 = vunpack.c.l.b16 %v329
    %v353 = vpack.c.b16 %v346, %v345
    %v354 = vpack.c.b16 %v348, %v347
    %v355 = vpack.c.b16 %v350, %v349
    %v356 = vpack.c.b16 %v352, %v351
    %vm361 = vcmask 523264
    %v363 = vsel %vm361, %v320, 0
    %v366 = vsel %vm361, %v321, 0
    %368 = vmatprep.subr.bf16.mxu0 0
    %369 = vmatpush1.bf16.msra.mxu0 0
    %370 = vmatprep.subr.bf16.mxu0 0
    %371 = vmatpush1.bf16.msra.mxu0 0
    %372 = vmatprep.subr.bf16.mxu0 0
    %373 = vmatpush1.bf16.msra.mxu0 0
    %374 = vmatprep.subr.bf16.mxu0 0
    %375 = vmatpush1.bf16.msra.mxu0 0
    %376 = vmatprep.subr.bf16.mxu0 0
    %377 = vmatpush1.bf16.msra.mxu0 %v356
    %378 = vmatprep.subr.bf16.mxu0 0
    %379 = vmatpush1.bf16.msra.mxu0 %v355
    %380 = vmatprep.subr.bf16.mxu0 0
    %381 = vmatpush1.bf16.msra.mxu0 %v354
    %382 = vmatprep.subr.bf16.mxu0 0
    %383 = vmatpush1.bf16.msra.mxu0 %v353
    %384 = vmatprep.subr.bf16.mxu0 0
    %385 = vmatpush2.bf16.msra.mxu0 0
    %386 = vmatprep.subr.bf16.mxu0 0
    %387 = vmatpush2.bf16.msra.mxu0 0
    %388 = vmatprep.subr.bf16.mxu0 0
    %389 = vmatpush2.bf16.msra.mxu0 0
    %390 = vmatprep.subr.bf16.mxu0 0
    %391 = vmatpush2.bf16.msra.mxu0 0
    %392 = vmatprep.subr.bf16.mxu0 0
    %393 = vmatpush2.bf16.msra.mxu0 0
    %394 = vmatprep.subr.bf16.mxu0 0
    %395 = vmatpush2.bf16.msra.mxu0 0
    %396 = vmatprep.subr.bf16.mxu0 0
    %397 = vmatpush2.bf16.msra.mxu0 0
    %398 = vmatprep.subr.bf16.mxu0 0
    %399 = vmatpush2.bf16.msra.mxu0 0
    %400 = vmatprep.mubr.bf16.mxu0 0
    %401 = vmatmul.mubr.bf16.gmra.mxu0 %v363
    %v402 = vpop.f32.mrf.mxu0
    %v403 = vadd.f32 %v335, %v402
    %v404 = vpop.f32.mrf.mxu0
    %v405 = vpop.f32.mrf.mxu0
    %v406 = vadd.f32 %v335, %v405
    %v407 = vpop.f32.mrf.mxu0
    %408 = vmatprep.mubr.bf16.mxu0 0
    %409 = vmatmul.mubr.bf16.gmra.mxu0 %v366
    %v410 = vpop.f32.mrf.mxu0
    %v411 = vadd.f32 %v335, %v410
    %v412 = vpop.f32.mrf.mxu0
    %v413 = vpop.f32.mrf.mxu0
    %v414 = vadd.f32 %v335, %v413
    %v415 = vpop.f32.mrf.mxu0
    %416 = vdwg.mxu0
    %417 = vst [vmem:[#allocation2] sm:$0xff] %v403
    %418 = vst [vmem:[#allocation2 + $0x8] sm:$0xff] %v406
    %419 = vst [vmem:[#allocation2 + $0x10] sm:$0xff] %v411
    %420 = vst [vmem:[#allocation2 + $0x18] sm:$0xff] %v414
    // Predicated region
    $region22: #{encoder_forward.3} parent=1 // pred_check
      _
    $region23: #{encoder_forward.3} parent=1 // pred_check_branch
      %422 = sbr.rel (0) target = $region25
    $region24: #{encoder_forward.3} parent=1 // pred_region
      %s424 = ssub.s32 512, 512
      %425 = vsyncadd [#allocation3], %s424
      %s426 = sshll.u32 [#allocation2], 4
      %s427 = int_to_ptr.vmem [resolvable:$true] %s426
      %432 = dma.vmem_to_hbm [thread:$0]  %s427, 512, %s5, [#allocation3], 128, 128, 8
    $region25: #{encoder_forward.3} parent=1 // pred_fallthru
      _
    // Predicated region
    $region26: #{encoder_forward.3} parent=1 // pred_check
      _
    $region27: #{encoder_forward.3} parent=1 // pred_check_branch
      %434 = sbr.rel (0) target = $region29
    $region28: #{encoder_forward.3} parent=1 // pred_region
      %435 = dma.done [#allocation3], 512
    $region29: #{encoder_forward.3} parent=1 // pred_fallthru
      _
    %436 = vsyncpa [#allocation3], 1

</llo_original>
